<compile_context>
chip_gen: v6e
topology: v6e:2x2x1
jax: 0.10.0
libtpu: 0.0.40
codegen_flags: <defaults>
</compile_context>

<pallas_src>
import math

import jax
import jax.numpy as jnp
from jax import lax
from jax.experimental import pallas as pl
from jax.experimental.pallas import tpu as pltpu


def _round_up(x, m):
    return pl.cdiv(x, m) * m


# --------------------------------------------------------------------------- #
# Kernel                                                                      #
# --------------------------------------------------------------------------- #
def _make_ce_kernel(num_classes, tc, has_class_pad):
    """Streaming cosine-logit cross-entropy over class tiles of width `tc`."""

    def kernel(x_ref, wt_ref, label_ref, out_ref, xn_ref, m_ref, l_ref, t_ref):
        j = pl.program_id(1)           # class-tile index (reduction axis, last)
        nj = pl.num_programs(1)

        # --- once per batch tile: normalize x, init online-LSE state ---------
        @pl.when(j == 0)
        def _init():
            x = x_ref[...].astype(jnp.float32)                      # (tb, D)
            # F.normalize(x, dim=1): x / max(||x||, 1e-12)
            #   == x * rsqrt(max(sum(x^2), 1e-24))
            sumsq = jnp.sum(x * x, axis=1, keepdims=True)
            xn = x * lax.rsqrt(jnp.maximum(sumsq, jnp.float32(1e-24)))
            xn_ref[...] = xn.astype(xn_ref.dtype)
            m_ref[...] = jnp.full_like(m_ref, -1e30)                 # running max
            l_ref[...] = jnp.zeros_like(l_ref)                       # running sum-exp
            t_ref[...] = jnp.zeros_like(t_ref)                       # target logit

        # --- cosine logits for this class tile: (tb, D) @ (D, tc) on the MXU -
        logits = lax.dot_general(
            xn_ref[...], wt_ref[...],
            dimension_numbers=(((1,), (0,)), ((), ())),
            preferred_element_type=jnp.float32)                      # (tb, tc) f32

        tb = logits.shape[0]
        class_ids = j * tc + lax.broadcasted_iota(jnp.int32, (tb, tc), 1)

        # Mask padded classes only when padding exists (static specialization).
        # (-1e30 sentinel is safe because cosine logits are bounded in [-1, 1].)
        if has_class_pad:
            logits_m = jnp.where(class_ids < num_classes, logits, jnp.float32(-1e30))
        else:
            logits_m = logits

        # --- online logsumexp across class tiles ------------------------------
        m_prev = m_ref[...]
        m_new = jnp.maximum(m_prev, jnp.max(logits_m, axis=1, keepdims=True))
        l_ref[...] = (l_ref[...] * jnp.exp(m_prev - m_new)
                      + jnp.sum(jnp.exp(logits_m - m_new), axis=1, keepdims=True))
        m_ref[...] = m_new

        # --- pick the target-class logit (each label hits exactly one tile) ---
        label = label_ref[...]                                       # (tb, 1) int32
        t_ref[...] += jnp.sum(
            jnp.where(class_ids == label, logits, jnp.float32(0.0)),
            axis=1, keepdims=True)

        # --- finalize: per-sample loss = logsumexp - target logit -------------
        @pl.when(j == nj - 1)
        def _final():
            out_ref[...] = m_ref[...] + jnp.log(l_ref[...]) - t_ref[...]

    return kernel


# --------------------------------------------------------------------------- #
# Wrapper-side helpers                                                        #
# --------------------------------------------------------------------------- #
def select_tc(num_classes, in_features, *, batch_tile=256,
              compute_dtype=jnp.bfloat16, tc_max=2048, tc_align=256,
              vmem_budget=36 * 2**20):
    """Largest class-tile width (multiple of tc_align) that fits the VMEM budget."""
    wbytes = jnp.dtype(compute_dtype).itemsize
    tc = min(tc_max, _round_up(num_classes, tc_align))
    tc = _round_up(tc, tc_align)
    while tc > tc_align:
        need = (2 * in_features * tc * wbytes        # weight double buffer
                + 2 * batch_tile * in_features * 4   # x double buffer
                + batch_tile * in_features * wbytes  # xn scratch
                + 4 * batch_tile * tc * 4)           # logit/exp temporaries
        if need <= vmem_budget:
            break
        tc -= tc_align
    return max(int(tc), 128)


def prepare_weight(weight, *, tc, compute_dtype=jnp.bfloat16):
    """Row-normalize the (C, D) weight, transpose to (D, C_pad) and cast.

    This only depends on the parameter; cache the result across forward calls
    instead of recomputing it every step (halves total weight HBM traffic).
    """
    C, D = weight.shape
    w = weight.astype(jnp.float32)
    w_sumsq = jnp.sum(w * w, axis=1, keepdims=True)
    w_n = w * lax.rsqrt(jnp.maximum(w_sumsq, jnp.float32(1e-24)))
    c_pad = _round_up(C, tc)
    wt = w_n.T                                                      # (D, C)
    if c_pad != C:
        wt = jnp.pad(wt, ((0, 0), (0, c_pad - C)))
    return wt.astype(compute_dtype)


def cross_entropy_forward_prepared(x, wt, label, num_classes, *, tc, tb=None,
                                   compute_dtype=jnp.bfloat16,
                                   vmem_limit_bytes=None):
    """x: (B, D) f32, wt: (D, C_pad) prepared weight, label: (B,) int -> scalar."""
    B, D = x.shape
    Dw, c_pad = wt.shape
    assert D == Dw, "feature-dim mismatch"
    assert c_pad % tc == 0

    # Batch tiling: bounds VMEM at large B and is the megacore-parallel axis.
    if tb is None:
        tb = min(256, _round_up(B, 8))
    tb = _round_up(min(tb, _round_up(B, 8)), 8)
    b_pad = _round_up(B, tb)

    if b_pad != B:
        x = jnp.pad(x, ((0, b_pad - B), (0, 0)))
        label = jnp.pad(label, (0, b_pad - B))
    label2d = label.reshape(b_pad, 1).astype(jnp.int32)

    nb = b_pad // tb
    nj = c_pad // tc
    wbytes = jnp.dtype(compute_dtype).itemsize

    if vmem_limit_bytes is None:
        need = (2 * D * tc * wbytes          # weight double buffer
                + 2 * tb * D * 4             # x double buffer
                + tb * D * wbytes            # xn scratch
                + 6 * tb * tc * 4            # logit/exp temporaries (headroom)
                + (1 << 20))
        # Cap at 48 MiB so the same choice stays inside v7x's 64 MiB VMEM.
        vmem_limit_bytes = int(min(max(need, 32 * 2**20), 48 * 2**20))

    kernel = _make_ce_kernel(num_classes, tc, has_class_pad=(c_pad != num_classes))

    per_sample = pl.pallas_call(
        kernel,
        out_shape=jax.ShapeDtypeStruct((b_pad, 1), jnp.float32),
        grid_spec=pltpu.PrefetchScalarGridSpec(
            num_scalar_prefetch=0,
            grid=(nb, nj),                                 # class axis last (reduction)
            in_specs=[
                pl.BlockSpec((tb, D), lambda i, j: (i, 0)),   # x: per batch tile
                pl.BlockSpec((D, tc), lambda i, j: (0, j)),   # weight tile: pipelined
                pl.BlockSpec((tb, 1), lambda i, j: (i, 0)),   # labels
            ],
            out_specs=pl.BlockSpec((tb, 1), lambda i, j: (i, 0)),
            scratch_shapes=[
                pltpu.VMEM((tb, D), compute_dtype),   # normalized x
                pltpu.VMEM((tb, 1), jnp.float32),     # running max (online LSE)
                pltpu.VMEM((tb, 1), jnp.float32),     # running sum-exp
                pltpu.VMEM((tb, 1), jnp.float32),     # target logit
            ],
        ),
        compiler_params=pltpu.CompilerParams(
            # batch tiles are independent (megacore), class axis is the reduction
            dimension_semantics=("parallel", "arbitrary"),
            vmem_limit_bytes=vmem_limit_bytes,
        ),
    )(x, wt, label2d)

    # Tiny epilogue: mean over the real batch rows (drops padded rows).
    return jnp.sum(per_sample[:B, 0]) / jnp.float32(B)


def cross_entropy_forward(x, weight, label, *, tc=None, tb=None, use_bf16=True,
                          vmem_limit_bytes=None):
    """Convenience one-shot path. In a training loop, call prepare_weight()
    once and reuse its result with cross_entropy_forward_prepared()."""
    B, D = x.shape
    C, D2 = weight.shape
    assert D == D2, "feature-dim mismatch"
    compute_dtype = jnp.bfloat16 if use_bf16 else jnp.float32
    if tb is None:
        tb = min(256, _round_up(B, 8))
    if tc is None:
        tc = select_tc(C, D, batch_tile=tb, compute_dtype=compute_dtype)
    wt = prepare_weight(weight, tc=tc, compute_dtype=compute_dtype)
    return cross_entropy_forward_prepared(
        x, wt, label, C, tc=tc, tb=tb, compute_dtype=compute_dtype,
        vmem_limit_bytes=vmem_limit_bytes)


def init_weight(key, out_features, in_features):
    # kaiming_uniform_(a=sqrt(5)) on (out, in): bound = 1/sqrt(fan_in)
    bound = 1.0 / math.sqrt(in_features)
    return jax.random.uniform(
        key, (out_features, in_features), jnp.float32, minval=-bound, maxval=bound
    )


if __name__ == "__main__":
    B = 8
    IN_FEATURES = 32
    OUT_FEATURES = 256

    key = jax.random.PRNGKey(0)
    k_x, k_w, k_l = jax.random.split(key, 3)

    x = jax.random.normal(k_x, (B, IN_FEATURES), jnp.float32)
    weight = init_weight(k_w, OUT_FEATURES, IN_FEATURES)
    label = jax.random.randint(k_l, (B,), 0, OUT_FEATURES, jnp.int32)

    # Prepare (normalize/transpose/pad/cast) the weight ONCE; reuse across calls.
    compute_dtype = jnp.bfloat16
    tb = min(256, _round_up(B, 8))
    tc = select_tc(OUT_FEATURES, IN_FEATURES, batch_tile=tb,
                   compute_dtype=compute_dtype)
    wt = prepare_weight(weight, tc=tc, compute_dtype=compute_dtype)

    loss = cross_entropy_forward_prepared(
        x, wt, label, OUT_FEATURES, tc=tc, tb=tb, compute_dtype=compute_dtype)
    jax.block_until_ready(loss)

    # Plain-JAX f32 reference: nn.CrossEntropyLoss (mean) over cosine logits.
    x_n = x / jnp.maximum(jnp.linalg.norm(x, axis=1, keepdims=True), 1e-12)
    w_n = weight / jnp.maximum(jnp.linalg.norm(weight, axis=1, keepdims=True), 1e-12)
    cos = x_n @ w_n.T
    lse = jax.scipy.special.logsumexp(cos, axis=1)
    tgt = jnp.take_along_axis(cos, label[:, None], axis=1)[:, 0]
    ref = jnp.mean(lse - tgt)

    # bf16 MXU operands (f32 accumulation) -> slightly loose tolerance.
    assert jnp.allclose(loss, ref, atol=3e-2, rtol=3e-2), (loss, ref)
    print("KERNEL_OK")
</pallas_src>

<mosaic_0001>
module attributes {stable_mosaic.version = 11 : i64} {
  func.func @kernel(%arg0: i32, %arg1: i32, %arg2: memref<8x32xf32, #tpu.memory_space<vmem>>, %arg3: memref<32x256xbf16, #tpu.memory_space<vmem>>, %arg4: memref<8x1xi32, #tpu.memory_space<vmem>>, %arg5: memref<8x1xf32, #tpu.memory_space<vmem>>, %arg6: memref<8x32xbf16, #tpu.memory_space<vmem>>, %arg7: memref<8x1xf32, #tpu.memory_space<vmem>>, %arg8: memref<8x1xf32, #tpu.memory_space<vmem>>, %arg9: memref<8x1xf32, #tpu.memory_space<vmem>>) attributes {dimension_semantics = [#tpu.dimension_semantics<parallel>, #tpu.dimension_semantics<arbitrary>], iteration_bounds = array<i64: 1, 1>, scalar_prefetch = 0 : i64, scratch_operands = 4 : i64, tpu.core_type = #tpu.core_type<tc>, window_params = [{transform_indices = @transform_0, window_bounds = array<i64: 8, 32>}, {transform_indices = @transform_1, window_bounds = array<i64: 32, 256>}, {transform_indices = @transform_2, window_bounds = array<i64: 8, 1>}, {transform_indices = @transform_3, window_bounds = array<i64: 8, 1>}]} {
    %c0_i32 = arith.constant 0 : i32
    %0 = arith.cmpi eq, %arg1, %c0_i32 : i32
    %1 = arith.extui %0 : i1 to i32
    %c0_i32_0 = arith.constant 0 : i32
    %2 = arith.cmpi ne, %1, %c0_i32_0 : i32
    scf.if %2 {
      %c0_24 = arith.constant 0 : index
      %c0_25 = arith.constant 0 : index
      %39 = vector.load %arg2[%c0_24, %c0_25] : memref<8x32xf32, #tpu.memory_space<vmem>>, vector<8x32xf32>
      %40 = arith.mulf %39, %39 : vector<8x32xf32>
      %cst_26 = arith.constant dense<0.000000e+00> : vector<8xf32>
      %41 = vector.multi_reduction <add>, %40, %cst_26 [1] : vector<8x32xf32> to vector<8xf32>
      %42 = vector.shape_cast %41 : vector<8xf32> to vector<8x1xf32>
      %cst_27 = arith.constant 1.000000e-24 : f32
      %43 = vector.broadcast %cst_27 : f32 to vector<8x1xf32>
      %44 = arith.maximumf %42, %43 : vector<8x1xf32>
      %45 = math.rsqrt %44 : vector<8x1xf32>
      %46 = vector.broadcast %45 : vector<8x1xf32> to vector<8x32xf32>
      %47 = arith.mulf %39, %46 : vector<8x32xf32>
      %48 = arith.truncf %47 : vector<8x32xf32> to vector<8x32xbf16>
      %c0_28 = arith.constant 0 : index
      %c0_29 = arith.constant 0 : index
      %49 = vector.load %arg6[%c0_28, %c0_29] : memref<8x32xbf16, #tpu.memory_space<vmem>>, vector<8x32xbf16>
      tpu.vector_store %arg6[%c0_28, %c0_29], %48 {strides = array<i32>} : memref<8x32xbf16, #tpu.memory_space<vmem>>, vector<8x32xbf16>,
      %cst_30 = arith.constant -1.000000e+30 : f32
      %50 = vector.broadcast %cst_30 : f32 to vector<8x1xf32>
      %c0_31 = arith.constant 0 : index
      %c0_32 = arith.constant 0 : index
      %51 = vector.load %arg7[%c0_31, %c0_32] : memref<8x1xf32, #tpu.memory_space<vmem>>, vector<8x1xf32>
      tpu.vector_store %arg7[%c0_31, %c0_32], %50 {strides = array<i32>} : memref<8x1xf32, #tpu.memory_space<vmem>>, vector<8x1xf32>,
      %cst_33 = arith.constant 0.000000e+00 : f32
      %52 = vector.broadcast %cst_33 : f32 to vector<8x1xf32>
      %c0_34 = arith.constant 0 : index
      %c0_35 = arith.constant 0 : index
      %53 = vector.load %arg8[%c0_34, %c0_35] : memref<8x1xf32, #tpu.memory_space<vmem>>, vector<8x1xf32>
      tpu.vector_store %arg8[%c0_34, %c0_35], %52 {strides = array<i32>} : memref<8x1xf32, #tpu.memory_space<vmem>>, vector<8x1xf32>,
      %cst_36 = arith.constant 0.000000e+00 : f32
      %54 = vector.broadcast %cst_36 : f32 to vector<8x1xf32>
      %c0_37 = arith.constant 0 : index
      %c0_38 = arith.constant 0 : index
      %55 = vector.load %arg9[%c0_37, %c0_38] : memref<8x1xf32, #tpu.memory_space<vmem>>, vector<8x1xf32>
      tpu.vector_store %arg9[%c0_37, %c0_38], %54 {strides = array<i32>} : memref<8x1xf32, #tpu.memory_space<vmem>>, vector<8x1xf32>,
    } else {
    }
    %c0 = arith.constant 0 : index
    %c0_1 = arith.constant 0 : index
    %3 = vector.load %arg6[%c0, %c0_1] : memref<8x32xbf16, #tpu.memory_space<vmem>>, vector<8x32xbf16>
    %c0_2 = arith.constant 0 : index
    %c0_3 = arith.constant 0 : index
    %4 = vector.load %arg3[%c0_2, %c0_3] : memref<32x256xbf16, #tpu.memory_space<vmem>>, vector<32x256xbf16>
    %cst = arith.constant dense<0.000000e+00> : vector<8x256xf32>
    %5 = tpu.matmul %3, %4, %cst {dimension_numbers = #tpu.dot_dimension_numbers<[1], [0], [0], [1], [0, 0, 1, 1], [], []>} : vector<8x32xbf16>, vector<32x256xbf16>, vector<8x256xf32> -> vector<8x256xf32>
    %c256_i32 = arith.constant 256 : i32
    %6 = arith.muli %arg1, %c256_i32 : i32
    %7 = tpu.iota {dimensions = array<i32: 1>} : vector<8x256xi32>
    %8 = vector.broadcast %6 : i32 to vector<8x256xi32>
    %9 = arith.addi %8, %7 : vector<8x256xi32>
    %c0_4 = arith.constant 0 : index
    %c0_5 = arith.constant 0 : index
    %10 = vector.load %arg7[%c0_4, %c0_5] : memref<8x1xf32, #tpu.memory_space<vmem>>, vector<8x1xf32>
    %cst_6 = arith.constant dense<0xFF800000> : vector<8xf32>
    %11 = vector.multi_reduction <maximumf>, %5, %cst_6 [1] : vector<8x256xf32> to vector<8xf32>
    %12 = vector.shape_cast %11 : vector<8xf32> to vector<8x1xf32>
    %13 = arith.maximumf %10, %12 : vector<8x1xf32>
    %c0_7 = arith.constant 0 : index
    %c0_8 = arith.constant 0 : index
    %14 = vector.load %arg8[%c0_7, %c0_8] : memref<8x1xf32, #tpu.memory_space<vmem>>, vector<8x1xf32>
    %15 = arith.subf %10, %13 : vector<8x1xf32>
    %16 = math.exp %15 : vector<8x1xf32>
    %17 = arith.mulf %14, %16 : vector<8x1xf32>
    %18 = vector.broadcast %13 : vector<8x1xf32> to vector<8x256xf32>
    %19 = arith.subf %5, %18 : vector<8x256xf32>
    %20 = math.exp %19 : vector<8x256xf32>
    %cst_9 = arith.constant dense<0.000000e+00> : vector<8xf32>
    %21 = vector.multi_reduction <add>, %20, %cst_9 [1] : vector<8x256xf32> to vector<8xf32>
    %22 = vector.shape_cast %21 : vector<8xf32> to vector<8x1xf32>
    %23 = arith.addf %17, %22 : vector<8x1xf32>
    %c0_10 = arith.constant 0 : index
    %c0_11 = arith.constant 0 : index
    %24 = vector.load %arg8[%c0_10, %c0_11] : memref<8x1xf32, #tpu.memory_space<vmem>>, vector<8x1xf32>
    tpu.vector_store %arg8[%c0_10, %c0_11], %23 {strides = array<i32>} : memref<8x1xf32, #tpu.memory_space<vmem>>, vector<8x1xf32>,
    %c0_12 = arith.constant 0 : index
    %c0_13 = arith.constant 0 : index
    %25 = vector.load %arg7[%c0_12, %c0_13] : memref<8x1xf32, #tpu.memory_space<vmem>>, vector<8x1xf32>
    tpu.vector_store %arg7[%c0_12, %c0_13], %13 {strides = array<i32>} : memref<8x1xf32, #tpu.memory_space<vmem>>, vector<8x1xf32>,
    %c0_14 = arith.constant 0 : index
    %c0_15 = arith.constant 0 : index
    %26 = vector.load %arg4[%c0_14, %c0_15] : memref<8x1xi32, #tpu.memory_space<vmem>>, vector<8x1xi32>
    %c0_16 = arith.constant 0 : index
    %c0_17 = arith.constant 0 : index
    %27 = vector.load %arg9[%c0_16, %c0_17] : memref<8x1xf32, #tpu.memory_space<vmem>>, vector<8x1xf32>
    %28 = vector.broadcast %26 : vector<8x1xi32> to vector<8x256xi32>
    %29 = arith.cmpi eq, %9, %28 : vector<8x256xi32>
    %cst_18 = arith.constant 0.000000e+00 : f32
    %30 = vector.broadcast %cst_18 : f32 to vector<8x256xf32>
    %31 = arith.select %29, %5, %30 : vector<8x256xi1>, vector<8x256xf32>
    %cst_19 = arith.constant dense<0.000000e+00> : vector<8xf32>
    %32 = vector.multi_reduction <add>, %31, %cst_19 [1] : vector<8x256xf32> to vector<8xf32>
    %33 = vector.shape_cast %32 : vector<8xf32> to vector<8x1xf32>
    %34 = arith.addf %27, %33 : vector<8x1xf32>
    %c0_20 = arith.constant 0 : index
    %c0_21 = arith.constant 0 : index
    %35 = vector.load %arg9[%c0_20, %c0_21] : memref<8x1xf32, #tpu.memory_space<vmem>>, vector<8x1xf32>
    tpu.vector_store %arg9[%c0_20, %c0_21], %34 {strides = array<i32>} : memref<8x1xf32, #tpu.memory_space<vmem>>, vector<8x1xf32>,
    %c0_i32_22 = arith.constant 0 : i32
    %36 = arith.cmpi eq, %arg1, %c0_i32_22 : i32
    %37 = arith.extui %36 : i1 to i32
    %c0_i32_23 = arith.constant 0 : i32
    %38 = arith.cmpi ne, %37, %c0_i32_23 : i32
    scf.if %38 {
      %c0_24 = arith.constant 0 : index
      %c0_25 = arith.constant 0 : index
      %39 = vector.load %arg7[%c0_24, %c0_25] : memref<8x1xf32, #tpu.memory_space<vmem>>, vector<8x1xf32>
      %c0_26 = arith.constant 0 : index
      %c0_27 = arith.constant 0 : index
      %40 = vector.load %arg8[%c0_26, %c0_27] : memref<8x1xf32, #tpu.memory_space<vmem>>, vector<8x1xf32>
      %41 = math.log %40 : vector<8x1xf32>
      %42 = arith.addf %39, %41 : vector<8x1xf32>
      %c0_28 = arith.constant 0 : index
      %c0_29 = arith.constant 0 : index
      %43 = vector.load %arg9[%c0_28, %c0_29] : memref<8x1xf32, #tpu.memory_space<vmem>>, vector<8x1xf32>
      %44 = arith.subf %42, %43 : vector<8x1xf32>
      %c0_30 = arith.constant 0 : index
      %c0_31 = arith.constant 0 : index
      %45 = vector.load %arg5[%c0_30, %c0_31] : memref<8x1xf32, #tpu.memory_space<vmem>>, vector<8x1xf32>
      tpu.vector_store %arg5[%c0_30, %c0_31], %44 {strides = array<i32>} : memref<8x1xf32, #tpu.memory_space<vmem>>, vector<8x1xf32>,
    } else {
    }
    return
  }
  func.func @transform_0(%arg0: i32, %arg1: i32) -> (i32, i32) {
    %c0_i32 = arith.constant 0 : i32
    %c0_i32_0 = arith.constant 0 : i32
    return %arg0, %c0_i32 : i32, i32
  }
  func.func @transform_1(%arg0: i32, %arg1: i32) -> (i32, i32) {
    %c0_i32 = arith.constant 0 : i32
    %c0_i32_0 = arith.constant 0 : i32
    return %c0_i32, %arg1 : i32, i32
  }
  func.func @transform_2(%arg0: i32, %arg1: i32) -> (i32, i32) {
    %c0_i32 = arith.constant 0 : i32
    %c0_i32_0 = arith.constant 0 : i32
    return %arg0, %c0_i32 : i32, i32
  }
  func.func @transform_3(%arg0: i32, %arg1: i32) -> (i32, i32) {
    %c0_i32 = arith.constant 0 : i32
    %c0_i32_0 = arith.constant 0 : i32
    return %arg0, %c0_i32 : i32, i32
  }
}

</mosaic_0001>

<llo_original>
// kernel: tpu_custom_call.1
$region0: #{tpu_custom_call.1}
  #allocation0 [shape = 'u32[]', space=smem, size = 0x4, offset = 0x4, fixed_abs, tag = 'smem constant byte address 0x4 - core index']
  #allocation1 [shape = 'u32[144,128]{1,0:T(1,128)}', space=vmem, size = 0x12000, scoped, tag = 'internal scratch']
  #allocation2 [shape = 'bf16[8,32]{1,0:T(8,128)(2,1)}', space=vmem, size = 0x800, scoped, tag = 'scratch operand']
  #allocation3 [shape = 'f32[8,1]{1,0:T(8,128)}', space=vmem, size = 0x1000, scoped, tag = 'scratch operand']
  #allocation4 [shape = 'f32[8,1]{1,0:T(8,128)}', space=vmem, size = 0x1000, scoped, tag = 'scratch operand']
  #allocation5 [shape = 'f32[8,1]{1,0:T(8,128)}', space=vmem, size = 0x1000, scoped, tag = 'scratch operand']
  %s0 = inlined_call_operand.vmem [shape: f32[8,32], index: 0, kind: input, shape index: {}]
  %s1 = inlined_call_operand.hbm [shape: bf16[32,256], index: 1, kind: input, shape index: {}]
  %s2 = inlined_call_operand.vmem [shape: s32[8,1], index: 2, kind: input, shape index: {}]
  %s3 = inlined_call_operand.vmem [shape: f32[8,1], index: 3, kind: output, shape index: {}]
  %s4 = sld [smem:[#allocation0]]
  $region34: #{tpu_custom_call.1} parent=0
    _
  %s6 = ssub.s32 1, %s4
  %s7 = scalar_select 0, %s6, %s4
  $region1: #{tpu_custom_call.1} parent=0
    #allocation6 [shape = 'u8[16384]{0}', space=vmem, size = 0x4000, scoped, tag = 'input window, operand 1, single buffered']
    #allocation7 [shape = 's32[1]{0}', space=sflag, size = 0x4, scoped, tag = 'scoped memory for tpu_custom_call.1']
    %8 = vsyncpa [#allocation7], 0
    // Predicated region
    $region2: #{tpu_custom_call.1} parent=1 // pred_check
      _
    $region3: #{tpu_custom_call.1} parent=1 // pred_check_branch
      %10 = sbr.rel (0) target = $region5
    $region4: #{tpu_custom_call.1} parent=1 // pred_region
      _
    $region5: #{tpu_custom_call.1} parent=1 // pred_fallthru
      _
    // Predicated region
    $region6: #{tpu_custom_call.1} parent=1 // pred_check
      _
    $region7: #{tpu_custom_call.1} parent=1 // pred_check_branch
      %12 = sbr.rel (0) target = $region9
    $region8: #{tpu_custom_call.1} parent=1 // pred_region
      %s14 = ssub.s32 512, 512
      %15 = vsyncadd [#allocation7], %s14
      %s16 = sshll.u32 [#allocation6], 4
      %s17 = int_to_ptr.vmem [resolvable:$true] %s16
      %22 = dma.hbm_to_vmem [thread:$0]  %s1, 512, %s17, [#allocation7], 128, 128, 8
    $region9: #{tpu_custom_call.1} parent=1 // pred_fallthru
      _
    // Predicated region
    $region10: #{tpu_custom_call.1} parent=1 // pred_check
      _
    $region11: #{tpu_custom_call.1} parent=1 // pred_check_branch
      %24 = sbr.rel (0) target = $region13
    $region12: #{tpu_custom_call.1} parent=1 // pred_region
      _
    $region13: #{tpu_custom_call.1} parent=1 // pred_fallthru
      _
    // Predicated region
    $region14: #{tpu_custom_call.1} parent=1 // pred_check
      _
    $region15: #{tpu_custom_call.1} parent=1 // pred_check_branch
      %26 = sbr.rel (0) target = $region17
    $region16: #{tpu_custom_call.1} parent=1 // pred_region
      %27 = dma.done [#allocation7], 512
    $region17: #{tpu_custom_call.1} parent=1 // pred_fallthru
      _
    %p29 = scmp.eq.s32.totalorder 0, 0
    // Predicated region
    $region18: #{tpu_custom_call.1} parent=1 // pred_check
      %p30 = pneg %p29
    $region19: #{tpu_custom_call.1} parent=1 // pred_check_branch
      %32 = sbr.rel (%p30) target = $region21
    $region20: #{tpu_custom_call.1} parent=1 // pred_region
      %v33 = vld [vmem:[%s0] sm:$0xff]
      %v34 = vmul.f32 %v33, %v33
      %vm35 = vcmask 261120
      %v36 = vsel %vm35, %v34, 0.0
      %37 = vadd.xlane.f32.xlu0 %v36
      %v38 = vpop.xlane.xlu0 %37
      %v39 = vmax.f32 %v38, 1e-24
      %v40 = vrsqrt.pop %v39
      %v41 = vmul.f32 %v33, %v40
      %v42 = vpack.c.bf16 %v41, %v41
      %vm43 = vcmask 257024
      %44 = vst.msk [vmem:[#allocation2] sm:$0xf] %vm43, %v42
      %vm45 = vcmask 7168
      %46 = vst.msk [vmem:[#allocation3] sm:$0xff] %vm45, -1e+30
      %47 = vst.msk [vmem:[#allocation4] sm:$0xff] %vm45, 0.0
      %48 = vst.msk [vmem:[#allocation5] sm:$0xff] %vm45, 0.0
    $region21: #{tpu_custom_call.1} parent=1 // pred_fallthru
      _
    %v49 = vld [vmem:[#allocation2] sm:$0xf]
    %v50 = vld [vmem:[#allocation6] sm:$0xff]
    %v51 = vld [vmem:[#allocation6 + $0x8] sm:$0xff]
    %v52 = vld [vmem:[#allocation6 + $0x10] sm:$0xff]
    %v53 = vld [vmem:[#allocation6 + $0x18] sm:$0xff]
    %v58 = vunpack.c.l.b16 %v50
    %v59 = vunpack.c.h.b16 %v50
    %v60 = vunpack.c.l.b16 %v51
    %v61 = vunpack.c.h.b16 %v51
    %v62 = vunpack.c.l.b16 %v52
    %v63 = vunpack.c.h.b16 %v52
    %v64 = vunpack.c.l.b16 %v53
    %v65 = vunpack.c.h.b16 %v53
    %v66 = vpack.c.b16 %v60, %v58
    %v67 = vpack.c.b16 %v61, %v59
    %v68 = vpack.c.b16 %v64, %v62
    %v69 = vpack.c.b16 %v65, %v63
    %vm74 = vcmask 261120
    %v76 = vsel %vm74, %v49, 0
    %78 = vmatprep.subr.bf16.mxu0 0
    %79 = vmatpush1.bf16.msra.mxu0 0
    %80 = vmatprep.subr.bf16.mxu0 0
    %81 = vmatpush1.bf16.msra.mxu0 0
    %82 = vmatprep.subr.bf16.mxu0 0
    %83 = vmatpush1.bf16.msra.mxu0 0
    %84 = vmatprep.subr.bf16.mxu0 0
    %85 = vmatpush1.bf16.msra.mxu0 0
    %86 = vmatprep.subr.bf16.mxu0 0
    %87 = vmatpush1.bf16.msra.mxu0 0
    %88 = vmatprep.subr.bf16.mxu0 0
    %89 = vmatpush1.bf16.msra.mxu0 0
    %90 = vmatprep.subr.bf16.mxu0 %v69
    %91 = vmatpush1.bf16.msra.mxu0 %v68
    %92 = vmatprep.subr.bf16.mxu0 %v67
    %93 = vmatpush1.bf16.msra.mxu0 %v66
    %94 = vmatprep.subr.bf16.mxu0 0
    %95 = vmatpush2.bf16.msra.mxu0 0
    %96 = vmatprep.subr.bf16.mxu0 0
    %97 = vmatpush2.bf16.msra.mxu0 0
    %98 = vmatprep.subr.bf16.mxu0 0
    %99 = vmatpush2.bf16.msra.mxu0 0
    %100 = vmatprep.subr.bf16.mxu0 0
    %101 = vmatpush2.bf16.msra.mxu0 0
    %102 = vmatprep.subr.bf16.mxu0 0
    %103 = vmatpush2.bf16.msra.mxu0 0
    %104 = vmatprep.subr.bf16.mxu0 0
    %105 = vmatpush2.bf16.msra.mxu0 0
    %106 = vmatprep.subr.bf16.mxu0 0
    %107 = vmatpush2.bf16.msra.mxu0 0
    %108 = vmatprep.subr.bf16.mxu0 0
    %109 = vmatpush2.bf16.msra.mxu0 0
    %110 = vmatprep.mubr.bf16.mxu0 0
    %111 = vmatmul.mubr.bf16.gmra.mxu0 %v76
    %v112 = vpop.f32.mrf.mxu0
    %v113 = vadd.f32 0.0, %v112
    %v114 = vpop.f32.mrf.mxu0
    %v115 = vadd.f32 0.0, %v114
    %v116 = vpop.f32.mrf.mxu0
    %v117 = vpop.f32.mrf.mxu0
    %118 = vdwg.mxu0
    %s119 = smul.u32 0, 256
    %v120 = vlaneseq
    %v121 = vand.u32 %v120, 127
    %v122 = vadd.s32 %v121, 128
    %v123 = vstv %s119
    %v124 = vadd.s32 %v123, %v121
    %v125 = vadd.s32 %v123, %v122
    %v126 = vld [vmem:[#allocation3] sm:$0xff]
    %v127 = vmax.f32 %v113, %v115
    %128 = vmax.xlane.f32.xlu0 %v127
    %v129 = vpop.xlane.xlu0 %128
    %v130 = vmax.f32 %v126, %v129
    %v131 = vld [vmem:[#allocation4] sm:$0xff]
    %v132 = vsub.f32 %v126, %v130
    %v133 = vmul.f32 %v132, 1.442695
    %v134 = vpow.pop %v133
    %v135 = vmul.f32 %v131, %v134
    %137 = vset.pattern.permute.xlu0 0
    %138 = vperm.xlu0 %137, %v130
    %v139 = vpop.permute.xlu0 %138
    %v141 = vsub.f32 %v113, %v139
    %v142 = vsub.f32 %v115, %v139
    %v143 = vmul.f32 %v141, 1.442695
    %v144 = vpow.pop %v143
    %v145 = vmul.f32 %v142, 1.442695
    %v146 = vpow.pop %v145
    %v147 = vadd.f32 %v144, %v146
    %148 = vadd.xlane.f32.xlu0 %v147
    %v149 = vpop.xlane.xlu0 %148
    %v150 = vadd.f32 %v135, %v149
    %vm151 = vcmask 7168
    %152 = vst.msk [vmem:[#allocation4] sm:$0xff] %vm151, %v150
    %153 = vst.msk [vmem:[#allocation3] sm:$0xff] %vm151, %v130
    %v154 = vld [vmem:[%s2] sm:$0xff]
    %v155 = vld [vmem:[#allocation5] sm:$0xff]
    %156 = vset.pattern.permute.xlu0 0
    %157 = vperm.xlu0 %156, %v154
    %v158 = vpop.permute.xlu0 %157
    %vm159 = vcmp.eq.s32.totalorder %v124, %v158
    %vm160 = vcmp.eq.s32.totalorder %v125, %v158
    %v161 = vsel %vm159, %v113, 0.0
    %v162 = vsel %vm160, %v115, 0.0
    %v163 = vadd.f32 %v161, %v162
    %164 = vadd.xlane.f32.xlu0 %v163
    %v165 = vpop.xlane.xlu0 %164
    %v166 = vadd.f32 %v155, %v165
    %167 = vst.msk [vmem:[#allocation5] sm:$0xff] %vm151, %v166
    // Predicated region
    $region22: #{tpu_custom_call.1} parent=1 // pred_check
      %p168 = pneg %p29
    $region23: #{tpu_custom_call.1} parent=1 // pred_check_branch
      %170 = sbr.rel (%p168) target = $region25
    $region24: #{tpu_custom_call.1} parent=1 // pred_region
      %v171 = vld [vmem:[#allocation3] sm:$0xff]
      %v172 = vld [vmem:[#allocation4] sm:$0xff]
      %v173 = vlog2.pop %v172
      %v174 = vmul.f32 %v173, 0.6931472
      %v175 = vadd.f32 %v171, %v174
      %v176 = vld [vmem:[#allocation5] sm:$0xff]
      %v177 = vsub.f32 %v175, %v176
      %178 = vst.msk [vmem:[%s3] sm:$0xff] %vm151, %v177
    $region25: #{tpu_custom_call.1} parent=1 // pred_fallthru
      _
    // Predicated region
    $region26: #{tpu_custom_call.1} parent=1 // pred_check
      _
    $region27: #{tpu_custom_call.1} parent=1 // pred_check_branch
      %180 = sbr.rel (0) target = $region29
    $region28: #{tpu_custom_call.1} parent=1 // pred_region
      _
    $region29: #{tpu_custom_call.1} parent=1 // pred_fallthru
      _
    // Predicated region
    $region30: #{tpu_custom_call.1} parent=1 // pred_check
      _
    $region31: #{tpu_custom_call.1} parent=1 // pred_check_branch
      %182 = sbr.rel (0) target = $region33
    $region32: #{tpu_custom_call.1} parent=1 // pred_region
      _
    $region33: #{tpu_custom_call.1} parent=1 // pred_fallthru
      _
    %183 = vsyncpa [#allocation7], 1

</llo_original>
